<compile_context>
chip_gen: v7x
topology: tpu7x:2x2x1
jax: 0.10.0
libtpu: 0.0.40
codegen_flags: <defaults>
</compile_context>

<pallas_src>
import jax
import jax.numpy as jnp
from jax.experimental import pallas as pl
from jax.experimental.pallas import tpu as pltpu


def _round_up(n, m):
    return ((n + m - 1) // m) * m


def _linear_kernel(params_ref, x_ref, o_ref):
    # params_ref: SMEM (4,) f32 = [w0, w1, w2, b]
    # x_ref:      VMEM (3, tb_rows, 128) f32 -- three dense batch planes
    # o_ref:      VMEM (tb_rows, 128) f32   -- dense batch tile
    w0 = params_ref[0]
    w1 = params_ref[1]
    w2 = params_ref[2]
    b = params_ref[3]
    # Three dense (tb_rows, 128) planes; single scalar->vector broadcast for b.
    o_ref[...] = w0 * x_ref[0] + w1 * x_ref[1] + w2 * x_ref[2] + b


def _forward_feature_major(x_fm, weight, bias, *, block_rows=2048):
    """y = W @ x_fm + b with x_fm in feature-major (3, B) layout.

    Returns (B, 1) f32.  block_rows is the number of 128-wide batch rows per
    grid step (must be a multiple of 8); 2048 rows = 256K batch elements/tile.
    """
    K, B = x_fm.shape
    assert K == 3

    # Pad the batch only up to the next multiple of 128 (lane width), and only
    # if actually needed (no full-size zero-init copy).
    Bp = _round_up(max(B, 1), 128)
    if Bp != B:
        x_fm = jnp.pad(x_fm.astype(jnp.float32), ((0, 0), (0, Bp - B)))
    else:
        x_fm = x_fm.astype(jnp.float32)

    rows = Bp // 128
    x3 = x_fm.reshape(K, rows, 128)  # free reshape: batch spans sublanes+lanes

    # Tile rows: multiple of 8 for dense (8,128) vregs; full extent if small.
    tb_rows = block_rows if rows > block_rows else rows
    grid = (pl.cdiv(rows, tb_rows),)

    # 3 weights + bias as 32-bit scalars in SMEM.
    params = jnp.concatenate(
        [weight.reshape(-1).astype(jnp.float32), bias.reshape(-1).astype(jnp.float32)]
    )  # (4,)

    out = pl.pallas_call(
        _linear_kernel,
        out_shape=jax.ShapeDtypeStruct((rows, 128), jnp.float32),
        grid_spec=pltpu.PrefetchScalarGridSpec(
            num_scalar_prefetch=0,
            grid=grid,
            in_specs=[
                pl.BlockSpec(memory_space=pltpu.MemorySpace.SMEM),        # params (4,)
                pl.BlockSpec((K, tb_rows, 128), lambda i: (0, i, 0)),     # x planes
            ],
            out_specs=pl.BlockSpec((tb_rows, 128), lambda i: (i, 0)),     # dense out
        ),
        compiler_params=pltpu.CompilerParams(
            dimension_semantics=("parallel",),
        ),
    )(params, x3)

    # Free reshape back to PyTorch layout; padded tail elements are dropped.
    return out.reshape(-1)[:B].reshape(B, 1)


def multivariate_linear_regression(x, weight, bias, *, block_rows=2048):
    """Forward of nn.Linear(3, 1): y = x @ W.T + b.

    x: (B, 3); weight: (1, 3) (PyTorch layout); bias: (1,).  Returns (B, 1) f32.
    """
    B, K = x.shape
    N, Kw = weight.shape
    assert K == 3 and Kw == K and N == 1 and bias.shape == (N,)
    # TODO(synk): the (B,3)->(3,B) transpose is an extra HBM pass forced by the
    # PyTorch input layout; callers with feature-major data should call
    # _forward_feature_major directly (or fuse the transpose upstream).
    x_fm = x.astype(jnp.float32).T  # (3, B)
    return _forward_feature_major(x_fm, weight, bias, block_rows=block_rows)


if __name__ == "__main__":
    key = jax.random.PRNGKey(0)
    kx, kw, kb, kx2 = jax.random.split(key, 4)

    # Deterministic synthetic parameters for nn.Linear(3, 1): W (1,3), b (1,)
    weight = jax.random.normal(kw, (1, 3), dtype=jnp.float32) * 0.1
    bias = jax.random.normal(kb, (1,), dtype=jnp.float32) * 0.1

    # Small batch (exercises the single ragged tile / <128 path).
    batch = 8
    x = jax.random.normal(kx, (batch, 3), dtype=jnp.float32)
    out = multivariate_linear_regression(x, weight, bias)
    out = jax.block_until_ready(out)
    ref = x @ weight.T + bias
    assert out.shape == (batch, 1)
    assert jnp.allclose(out, ref, atol=1e-5, rtol=1e-5)

    # Non-multiple-of-128 batch (exercises the pad-to-128 tail path).
    batch2 = 300
    x2 = jax.random.normal(kx2, (batch2, 3), dtype=jnp.float32)
    out2 = jax.block_until_ready(multivariate_linear_regression(x2, weight, bias))
    ref2 = x2 @ weight.T + bias
    assert out2.shape == (batch2, 1)
    assert jnp.allclose(out2, ref2, atol=1e-5, rtol=1e-5)

    print("KERNEL_OK")
</pallas_src>

<mosaic_0001>
module attributes {stable_mosaic.version = 11 : i64} {
  func.func @_linear_kernel(%arg0: i32, %arg1: memref<4xf32, #tpu.memory_space<smem>>, %arg2: memref<3x1x128xf32, #tpu.memory_space<vmem>>, %arg3: memref<1x128xf32, #tpu.memory_space<vmem>>) attributes {dimension_semantics = [#tpu.dimension_semantics<parallel>], iteration_bounds = array<i64: 1>, scalar_prefetch = 0 : i64, scratch_operands = 0 : i64, tpu.core_type = #tpu.core_type<tc>, window_params = [{transform_indices = @transform_0, window_bounds = array<i64: 4>}, {transform_indices = @transform_1, window_bounds = array<i64: 3, 1, 128>}, {transform_indices = @transform_2, window_bounds = array<i64: 1, 128>}]} {
    %c0 = arith.constant 0 : index
    %0 = memref.load %arg1[%c0] : memref<4xf32, #tpu.memory_space<smem>>
    %c1 = arith.constant 1 : index
    %1 = memref.load %arg1[%c1] : memref<4xf32, #tpu.memory_space<smem>>
    %c2 = arith.constant 2 : index
    %2 = memref.load %arg1[%c2] : memref<4xf32, #tpu.memory_space<smem>>
    %c3 = arith.constant 3 : index
    %3 = memref.load %arg1[%c3] : memref<4xf32, #tpu.memory_space<smem>>
    %c0_0 = arith.constant 0 : index
    %c0_1 = arith.constant 0 : index
    %c0_2 = arith.constant 0 : index
    %4 = vector.load %arg2[%c0_0, %c0_1, %c0_2] : memref<3x1x128xf32, #tpu.memory_space<vmem>>, vector<1x1x128xf32>
    %5 = vector.shape_cast %4 : vector<1x1x128xf32> to vector<1x128xf32>
    %6 = vector.broadcast %0 : f32 to vector<1x128xf32>
    %7 = arith.mulf %6, %5 : vector<1x128xf32>
    %c1_3 = arith.constant 1 : index
    %c0_4 = arith.constant 0 : index
    %c0_5 = arith.constant 0 : index
    %8 = vector.load %arg2[%c1_3, %c0_4, %c0_5] : memref<3x1x128xf32, #tpu.memory_space<vmem>>, vector<1x1x128xf32>
    %9 = vector.shape_cast %8 : vector<1x1x128xf32> to vector<1x128xf32>
    %10 = vector.broadcast %1 : f32 to vector<1x128xf32>
    %11 = arith.mulf %10, %9 : vector<1x128xf32>
    %12 = arith.addf %7, %11 : vector<1x128xf32>
    %c2_6 = arith.constant 2 : index
    %c0_7 = arith.constant 0 : index
    %c0_8 = arith.constant 0 : index
    %13 = vector.load %arg2[%c2_6, %c0_7, %c0_8] : memref<3x1x128xf32, #tpu.memory_space<vmem>>, vector<1x1x128xf32>
    %14 = vector.shape_cast %13 : vector<1x1x128xf32> to vector<1x128xf32>
    %15 = vector.broadcast %2 : f32 to vector<1x128xf32>
    %16 = arith.mulf %15, %14 : vector<1x128xf32>
    %17 = arith.addf %12, %16 : vector<1x128xf32>
    %18 = vector.broadcast %3 : f32 to vector<1x128xf32>
    %19 = arith.addf %17, %18 : vector<1x128xf32>
    %c0_9 = arith.constant 0 : index
    %c0_10 = arith.constant 0 : index
    %20 = vector.load %arg3[%c0_9, %c0_10] : memref<1x128xf32, #tpu.memory_space<vmem>>, vector<1x128xf32>
    tpu.vector_store %arg3[%c0_9, %c0_10], %19 {strides = array<i32>} : memref<1x128xf32, #tpu.memory_space<vmem>>, vector<1x128xf32>,
    return
  }
  func.func @transform_0(%arg0: i32) -> i32 {
    %c0_i32 = arith.constant 0 : i32
    %c0_i32_0 = arith.constant 0 : i32
    return %c0_i32 : i32
  }
  func.func @transform_1(%arg0: i32) -> (i32, i32, i32) {
    %c0_i32 = arith.constant 0 : i32
    %c0_i32_0 = arith.constant 0 : i32
    %c0_i32_1 = arith.constant 0 : i32
    return %c0_i32, %arg0, %c0_i32_0 : i32, i32, i32
  }
  func.func @transform_2(%arg0: i32) -> (i32, i32) {
    %c0_i32 = arith.constant 0 : i32
    %c0_i32_0 = arith.constant 0 : i32
    return %arg0, %c0_i32 : i32, i32
  }
}

</mosaic_0001>

<llo_original>
// kernel: tpu_custom_call.1
$region0: #{tpu_custom_call.1}
  #allocation0 [shape = 'u32[]', space=smem, size = 0x4, offset = 0x4, fixed_abs, tag = 'smem constant byte address 0x4 - core index']
  #allocation1 [shape = 'u32[144,128]{1,0:T(1,128)}', space=vmem, size = 0x12000, scoped, tag = 'internal scratch']
  %s0 = inlined_call_operand.hbm [shape: f32[4], index: 0, kind: input, shape index: {}]
  %s1 = inlined_call_operand.vmem [shape: f32[3,1,128], index: 1, kind: input, shape index: {}]
  %s2 = inlined_call_operand.hbm [shape: f32[1,128], index: 2, kind: output, shape index: {}]
  %s3 = sld [smem:[#allocation0]]
  $region22: #{tpu_custom_call.1} parent=0
    _
  %s5 = ssub.s32 1, %s3
  %s6 = scalar_select 0, %s5, %s3
  $region1: #{tpu_custom_call.1} parent=0
    #allocation2 [shape = 'u8[512]{0}', space=smem, size = 0x200, scoped, tag = 'input window, operand 0, single buffered']
    #allocation3 [shape = 's32[1]{0}', space=sflag, size = 0x4, scoped, tag = 'scoped memory for tpu_custom_call.1']
    #allocation4 [shape = 's32[1]{0}', space=sflag, size = 0x4, scoped, tag = 'scoped memory for tpu_custom_call.1']
    #allocation5 [shape = 'u8[512]{0}', space=vmem, size = 0x400, scoped, tag = 'output window, operand 0, single buffered']
    %7 = vsyncpa [#allocation4], 0
    %8 = vsyncpa [#allocation3], 0
    // Predicated region
    $region2: #{tpu_custom_call.1} parent=1 // pred_check
      _
    $region3: #{tpu_custom_call.1} parent=1 // pred_check_branch
      %10 = sbr.rel (0) target = $region5
    $region4: #{tpu_custom_call.1} parent=1 // pred_region
      %s12 = ssub.s32 16, 16
      %13 = vsyncadd [#allocation4], %s12
      %16 = dma.hbm_to_smem %s0, 16, [#allocation2], [#allocation4]
    $region5: #{tpu_custom_call.1} parent=1 // pred_fallthru
      _
    // Predicated region
    $region6: #{tpu_custom_call.1} parent=1 // pred_check
      _
    $region7: #{tpu_custom_call.1} parent=1 // pred_check_branch
      %18 = sbr.rel (0) target = $region9
    $region8: #{tpu_custom_call.1} parent=1 // pred_region
      _
    $region9: #{tpu_custom_call.1} parent=1 // pred_fallthru
      _
    // Predicated region
    $region10: #{tpu_custom_call.1} parent=1 // pred_check
      _
    $region11: #{tpu_custom_call.1} parent=1 // pred_check_branch
      %20 = sbr.rel (0) target = $region13
    $region12: #{tpu_custom_call.1} parent=1 // pred_region
      %21 = dma.done [#allocation4], 16
    $region13: #{tpu_custom_call.1} parent=1 // pred_fallthru
      _
    %22 = sfence
    %s23 = sld [smem:[#allocation2]]
    %s24 = sld [smem:[#allocation2 + $0x1]]
    %s25 = sld [smem:[#allocation2 + $0x2]]
    %s26 = sld [smem:[#allocation2 + $0x3]]
    %v27 = vld [vmem:[%s1] sm:$0x1]
    %v28 = vstv %s23
    %v29 = vmul.f32 %v28, %v27
    %s30 = scalar_lea.vmem %s1, 1
    %v31 = vld [vmem:[%s30] sm:$0x1]
    %v32 = vstv %s24
    %v33 = vmul.f32 %v32, %v31
    %v34 = vadd.f32 %v29, %v33
    %s35 = scalar_lea.vmem %s1, 2
    %v36 = vld [vmem:[%s35] sm:$0x1]
    %v37 = vstv %s25
    %v38 = vmul.f32 %v37, %v36
    %v39 = vadd.f32 %v34, %v38
    %v40 = vstv %s26
    %v41 = vadd.f32 %v39, %v40
    %42 = vst [vmem:[#allocation5] sm:$0x1] %v41
    // Predicated region
    $region14: #{tpu_custom_call.1} parent=1 // pred_check
      _
    $region15: #{tpu_custom_call.1} parent=1 // pred_check_branch
      %44 = sbr.rel (0) target = $region17
    $region16: #{tpu_custom_call.1} parent=1 // pred_region
      %s46 = ssub.s32 16, 16
      %47 = vsyncadd [#allocation3], %s46
      %s49 = sshll.u32 [#allocation5], 4
      %s50 = int_to_ptr.vmem [resolvable:$true] %s49
      %52 = dma.vmem_to_hbm [thread:$0]  %s50, 16, %s2, [#allocation3]
    $region17: #{tpu_custom_call.1} parent=1 // pred_fallthru
      _
    // Predicated region
    $region18: #{tpu_custom_call.1} parent=1 // pred_check
      _
    $region19: #{tpu_custom_call.1} parent=1 // pred_check_branch
      %54 = sbr.rel (0) target = $region21
    $region20: #{tpu_custom_call.1} parent=1 // pred_region
      %55 = dma.done [#allocation3], 16
    $region21: #{tpu_custom_call.1} parent=1 // pred_fallthru
      _
    %56 = vsyncpa [#allocation3], 1
    %57 = vsyncpa [#allocation4], 1

</llo_original>
